<compile_context>
chip_gen: v7x
topology: tpu7x:2x2x1
jax: 0.10.0
libtpu: 0.0.40
codegen_flags: <defaults>
</compile_context>

<pallas_src>
import jax
import jax.numpy as jnp
from jax.experimental import pallas as pl
from jax.experimental.pallas import tpu as pltpu


def global_attention_patch_kernel(x_ref, yT_ref, m_ref,
                                  wqv_ref, bqv_ref,
                                  wkT_ref, bk_ref,
                                  gamma_ref, o_ref):
    TB, C, HW = x_ref.shape
    gamma = gamma_ref[0, 0]                       # scalar read from SMEM

    wqv = wqv_ref[...]                            # (2C, C) bf16  (Wq ; Wv fused)
    wkT = wkT_ref[...]                            # (C, C)  bf16  (Wk transposed)
    bqv = bqv_ref[...]                            # (2C, 1) f32
    bk = bk_ref[...]                              # (1, C)  f32

    # TB is small & static -> this Python loop is unrolled at trace time.
    # Row-wise softmax / blend are done per batch element: fusing them across
    # TB*C rows would need an unaligned sublane relayout when C % 8 != 0.
    for b in range(TB):
        xb = x_ref[b]                             # (C, HW)  f32
        mb = m_ref[b]                             # (C, HW)  f32
        yTb = yT_ref[b]                           # (HW, C)  bf16

        # fused 1x1 convs on the x path: [q ; v] = Wqv @ x + bqv
        qv = jnp.dot(wqv, xb.astype(jnp.bfloat16),
                     preferred_element_type=jnp.float32) + bqv        # (2C, HW)
        q = qv[:C]                                # (C, HW)
        v = qv[C:]                                # (C, HW)

        # key produced directly in transposed layout: kT = yT @ WkT + bk
        kT = jnp.dot(yTb, wkT, preferred_element_type=jnp.float32) + bk   # (HW, C)

        # channel correlation q @ kT -> (C, C), native MXU operands (no transpose)
        cc = jnp.dot(q.astype(jnp.bfloat16), kT.astype(jnp.bfloat16),
                     preferred_element_type=jnp.float32)

        # (C, C) @ (C, HW) -> (C, HW)
        cc2 = jnp.dot(cc.astype(jnp.bfloat16), mb.astype(jnp.bfloat16),
                      preferred_element_type=jnp.float32)

        # numerically-stable softmax over HW (normalize via EUP reciprocal)
        mx = jnp.max(cc2, axis=-1, keepdims=True)
        e = jnp.exp(cc2 - mx)
        energy = e * pl.reciprocal(jnp.sum(e, axis=-1, keepdims=True),
                                   approx=True)

        attented = energy * v                     # (C, HW)
        o_ref[b] = xb * mb + gamma * (1.0 - mb) * attented


def _pick_tb(B, C, HW):
    """Largest batch tile that (a) divides B, (b) keeps the per-step VMEM
    footprint modest, preferring an even number of grid steps (v7x has two
    TensorCores) as long as the vreg sublanes stay filled (TB*C >= 8)."""
    budget = 2 << 20                                        # bytes of I/O blocks per step
    per_b = 3 * C * HW * 4 + HW * max(C, 128) * 2           # x,m,out f32 + lane-padded yT bf16
    max_tb = max(1, budget // per_b)
    divs = [d for d in range(1, B + 1) if B % d == 0 and d <= max_tb]
    if not divs:
        divs = [1]
    even = [d for d in divs if (B // d) % 2 == 0 and d * C >= 8]
    return max(even) if even else max(divs)


def global_attention_patch(x, y, m, wq, bq, wk, bk, wv, bv, gamma):
    B, C, H, W = x.shape
    HW = H * W

    xf = x.reshape(B, C, HW).astype(jnp.float32)
    mf = m.reshape(B, C, HW).astype(jnp.float32)
    # y is only ever a matmul operand: pre-transpose + bf16 (halves its HBM
    # traffic and removes the in-kernel transpose for q.kT).
    yT = jnp.transpose(y.reshape(B, C, HW), (0, 2, 1)).astype(jnp.bfloat16)  # (B, HW, C)

    # fuse the two x-path 1x1 convs into a single (2C, C) weight
    wqv = jnp.concatenate([wq, wv], axis=0).astype(jnp.bfloat16)             # (2C, C)
    bqv = jnp.concatenate([bq, bv], axis=0).reshape(2 * C, 1).astype(jnp.float32)
    wkT = jnp.transpose(wk).astype(jnp.bfloat16)                             # (C, C)
    bk_row = bk.reshape(1, C).astype(jnp.float32)
    g2 = gamma.reshape(1, 1).astype(jnp.float32)

    TB = _pick_tb(B, C, HW)
    grid = (B // TB,)

    xm_spec = pl.BlockSpec((TB, C, HW), lambda b: (b, 0, 0))
    yT_spec = pl.BlockSpec((TB, HW, C), lambda b: (b, 0, 0))
    out_spec = pl.BlockSpec((TB, C, HW), lambda b: (b, 0, 0))
    wqv_spec = pl.BlockSpec((2 * C, C), lambda b: (0, 0))
    bqv_spec = pl.BlockSpec((2 * C, 1), lambda b: (0, 0))
    wkT_spec = pl.BlockSpec((C, C), lambda b: (0, 0))
    bk_spec = pl.BlockSpec((1, C), lambda b: (0, 0))
    g_spec = pl.BlockSpec(memory_space=pltpu.MemorySpace.SMEM)

    cost = pl.CostEstimate(
        flops=10 * C * C * HW * B + 8 * C * HW * B,
        transcendentals=C * HW * B,
        bytes_accessed=3 * B * C * HW * 4 + B * HW * C * 2
                       + 3 * C * C * 2 + (3 * C + 1) * 4)

    out = pl.pallas_call(
        global_attention_patch_kernel,
        out_shape=jax.ShapeDtypeStruct((B, C, HW), jnp.float32),
        grid_spec=pltpu.PrefetchScalarGridSpec(
            num_scalar_prefetch=0,
            grid=grid,
            in_specs=[xm_spec, yT_spec, xm_spec,
                      wqv_spec, bqv_spec, wkT_spec, bk_spec, g_spec],
            out_specs=out_spec,
        ),
        compiler_params=pltpu.CompilerParams(
            dimension_semantics=("parallel",),
            vmem_limit_bytes=32 * 1024 * 1024),
        cost_estimate=cost,
    )(xf, yT, mf, wqv, bqv, wkT, bk_row, g2)
    return out.reshape(B, C, H, W)


def _reference(x, y, m, wq, bq, wk, bk, wv, bv, gamma):
    """Pure-JAX f32 replica of the PyTorch forward, for verification."""
    B, C, H, W = x.shape
    HW = H * W
    xf = x.reshape(B, C, HW)
    yf = y.reshape(B, C, HW)
    mf = m.reshape(B, C, HW)
    q = jnp.einsum('oc,bcp->bop', wq, xf) + bq[None, :, None]
    k = jnp.einsum('oc,bcp->bop', wk, yf) + bk[None, :, None]
    v = jnp.einsum('oc,bcp->bop', wv, xf) + bv[None, :, None]
    cc = jnp.einsum('bcp,bdp->bcd', q, k)          # (B, C, C)
    cc2 = jnp.einsum('bcd,bdp->bcp', cc, mf)       # (B, C, HW)
    energy = jax.nn.softmax(cc2, axis=-1)
    attented = (energy * v).reshape(B, C, H, W)
    return x * m + gamma[0] * (1.0 - m) * attented


if __name__ == "__main__":
    B, C, H, W = 2, 4, 16, 16

    key = jax.random.PRNGKey(0)
    kx, ky, km, kwq, kbq, kwk, kbk, kwv, kbv = jax.random.split(key, 9)

    x = jax.random.normal(kx, (B, C, H, W), dtype=jnp.float32)
    y = jax.random.normal(ky, (B, C, H, W), dtype=jnp.float32)
    # mask-like input in [0, 1]
    m = jax.random.uniform(km, (B, C, H, W), dtype=jnp.float32)

    # 1x1-conv parameters (Conv2d(C, C, 1) -> (C, C) weight + (C,) bias)
    wq = 0.1 * jax.random.normal(kwq, (C, C), dtype=jnp.float32)
    bq = 0.1 * jax.random.normal(kbq, (C,), dtype=jnp.float32)
    wk = 0.1 * jax.random.normal(kwk, (C, C), dtype=jnp.float32)
    bk = 0.1 * jax.random.normal(kbk, (C,), dtype=jnp.float32)
    wv = 0.1 * jax.random.normal(kwv, (C, C), dtype=jnp.float32)
    bv = 0.1 * jax.random.normal(kbv, (C,), dtype=jnp.float32)
    gamma = jnp.array([1.0], dtype=jnp.float32)

    out = global_attention_patch(x, y, m, wq, bq, wk, bk, wv, bv, gamma)
    out = jax.block_until_ready(out)

    ref = _reference(x, y, m, wq, bq, wk, bk, wv, bv, gamma)
    assert out.shape == (B, C, H, W)
    # bf16 matmul inputs + approx reciprocal -> slightly looser tolerance than pure f32
    assert jnp.allclose(out, ref, atol=2e-3, rtol=2e-3), "mismatch vs reference"

    print("KERNEL_OK")
</pallas_src>

<mosaic_0001>
module attributes {stable_mosaic.version = 11 : i64} {
  func.func @global_attention_patch_kernel(%arg0: i32, %arg1: memref<2x4x256xf32, #tpu.memory_space<vmem>>, %arg2: memref<2x256x4xbf16, #tpu.memory_space<vmem>>, %arg3: memref<2x4x256xf32, #tpu.memory_space<vmem>>, %arg4: memref<8x4xbf16, #tpu.memory_space<vmem>>, %arg5: memref<8x1xf32, #tpu.memory_space<vmem>>, %arg6: memref<4x4xbf16, #tpu.memory_space<vmem>>, %arg7: memref<1x4xf32, #tpu.memory_space<vmem>>, %arg8: memref<1x1xf32, #tpu.memory_space<smem>>, %arg9: memref<2x4x256xf32, #tpu.memory_space<vmem>>) attributes {dimension_semantics = [#tpu.dimension_semantics<parallel>], iteration_bounds = array<i64: 1>, scalar_prefetch = 0 : i64, scratch_operands = 0 : i64, tpu.core_type = #tpu.core_type<tc>, window_params = [{transform_indices = @transform_0, window_bounds = array<i64: 2, 4, 256>}, {transform_indices = @transform_1, window_bounds = array<i64: 2, 256, 4>}, {transform_indices = @transform_2, window_bounds = array<i64: 2, 4, 256>}, {pipeline_mode = #tpu.pipeline_mode<synchronous>, transform_indices = @transform_3, window_bounds = array<i64: 8, 4>}, {pipeline_mode = #tpu.pipeline_mode<synchronous>, transform_indices = @transform_4, window_bounds = array<i64: 8, 1>}, {pipeline_mode = #tpu.pipeline_mode<synchronous>, transform_indices = @transform_5, window_bounds = array<i64: 4, 4>}, {pipeline_mode = #tpu.pipeline_mode<synchronous>, transform_indices = @transform_6, window_bounds = array<i64: 1, 4>}, {transform_indices = @transform_7, window_bounds = array<i64: 1, 1>}, {transform_indices = @transform_8, window_bounds = array<i64: 2, 4, 256>}]} {
    %c0 = arith.constant 0 : index
    %c0_0 = arith.constant 0 : index
    %0 = memref.load %arg8[%c0, %c0_0] : memref<1x1xf32, #tpu.memory_space<smem>>
    %c0_1 = arith.constant 0 : index
    %c0_2 = arith.constant 0 : index
    %1 = vector.load %arg4[%c0_1, %c0_2] : memref<8x4xbf16, #tpu.memory_space<vmem>>, vector<8x4xbf16>
    %c0_3 = arith.constant 0 : index
    %c0_4 = arith.constant 0 : index
    %2 = vector.load %arg6[%c0_3, %c0_4] : memref<4x4xbf16, #tpu.memory_space<vmem>>, vector<4x4xbf16>
    %c0_5 = arith.constant 0 : index
    %c0_6 = arith.constant 0 : index
    %3 = vector.load %arg5[%c0_5, %c0_6] : memref<8x1xf32, #tpu.memory_space<vmem>>, vector<8x1xf32>
    %c0_7 = arith.constant 0 : index
    %c0_8 = arith.constant 0 : index
    %4 = vector.load %arg7[%c0_7, %c0_8] : memref<1x4xf32, #tpu.memory_space<vmem>>, vector<1x4xf32>
    %c0_9 = arith.constant 0 : index
    %c0_10 = arith.constant 0 : index
    %c0_11 = arith.constant 0 : index
    %5 = vector.load %arg1[%c0_9, %c0_10, %c0_11] : memref<2x4x256xf32, #tpu.memory_space<vmem>>, vector<1x4x256xf32>
    %6 = vector.shape_cast %5 : vector<1x4x256xf32> to vector<4x256xf32>
    %c0_12 = arith.constant 0 : index
    %c0_13 = arith.constant 0 : index
    %c0_14 = arith.constant 0 : index
    %7 = vector.load %arg3[%c0_12, %c0_13, %c0_14] : memref<2x4x256xf32, #tpu.memory_space<vmem>>, vector<1x4x256xf32>
    %8 = vector.shape_cast %7 : vector<1x4x256xf32> to vector<4x256xf32>
    %c0_15 = arith.constant 0 : index
    %c0_16 = arith.constant 0 : index
    %c0_17 = arith.constant 0 : index
    %9 = vector.load %arg2[%c0_15, %c0_16, %c0_17] : memref<2x256x4xbf16, #tpu.memory_space<vmem>>, vector<1x256x4xbf16>
    %10 = vector.shape_cast %9 : vector<1x256x4xbf16> to vector<256x4xbf16>
    %11 = arith.truncf %6 : vector<4x256xf32> to vector<4x256xbf16>
    %cst = arith.constant dense<0.000000e+00> : vector<8x256xf32>
    %12 = tpu.matmul %1, %11, %cst {dimension_numbers = #tpu.dot_dimension_numbers<[1], [0], [0], [1], [0, 0, 1, 1], [], []>} : vector<8x4xbf16>, vector<4x256xbf16>, vector<8x256xf32> -> vector<8x256xf32>
    %13 = vector.broadcast %3 : vector<8x1xf32> to vector<8x256xf32>
    %14 = arith.addf %12, %13 : vector<8x256xf32>
    %15 = vector.extract_strided_slice %14 {offsets = [0, 0], sizes = [4, 256], strides = [1, 1]} : vector<8x256xf32> to vector<4x256xf32>
    %16 = vector.extract_strided_slice %14 {offsets = [4, 0], sizes = [4, 256], strides = [1, 1]} : vector<8x256xf32> to vector<4x256xf32>
    %cst_18 = arith.constant dense<0.000000e+00> : vector<256x4xf32>
    %17 = tpu.matmul %10, %2, %cst_18 {dimension_numbers = #tpu.dot_dimension_numbers<[1], [0], [0], [1], [0, 0, 1, 1], [], []>} : vector<256x4xbf16>, vector<4x4xbf16>, vector<256x4xf32> -> vector<256x4xf32>
    %18 = vector.broadcast %4 : vector<1x4xf32> to vector<256x4xf32>
    %19 = arith.addf %17, %18 : vector<256x4xf32>
    %20 = arith.truncf %15 : vector<4x256xf32> to vector<4x256xbf16>
    %21 = arith.truncf %19 : vector<256x4xf32> to vector<256x4xbf16>
    %cst_19 = arith.constant dense<0.000000e+00> : vector<4x4xf32>
    %22 = tpu.matmul %20, %21, %cst_19 {dimension_numbers = #tpu.dot_dimension_numbers<[1], [0], [0], [1], [0, 0, 1, 1], [], []>} : vector<4x256xbf16>, vector<256x4xbf16>, vector<4x4xf32> -> vector<4x4xf32>
    %23 = arith.truncf %22 : vector<4x4xf32> to vector<4x4xbf16>
    %24 = arith.truncf %8 : vector<4x256xf32> to vector<4x256xbf16>
    %cst_20 = arith.constant dense<0.000000e+00> : vector<4x256xf32>
    %25 = tpu.matmul %23, %24, %cst_20 {dimension_numbers = #tpu.dot_dimension_numbers<[1], [0], [0], [1], [0, 0, 1, 1], [], []>} : vector<4x4xbf16>, vector<4x256xbf16>, vector<4x256xf32> -> vector<4x256xf32>
    %cst_21 = arith.constant dense<0xFF800000> : vector<4xf32>
    %26 = vector.multi_reduction <maximumf>, %25, %cst_21 [1] : vector<4x256xf32> to vector<4xf32>
    %27 = vector.shape_cast %26 : vector<4xf32> to vector<4x1xf32>
    %28 = vector.broadcast %27 : vector<4x1xf32> to vector<4x256xf32>
    %29 = arith.subf %25, %28 : vector<4x256xf32>
    %30 = math.exp %29 : vector<4x256xf32>
    %cst_22 = arith.constant dense<0.000000e+00> : vector<4xf32>
    %31 = vector.multi_reduction <add>, %30, %cst_22 [1] : vector<4x256xf32> to vector<4xf32>
    %32 = vector.shape_cast %31 : vector<4xf32> to vector<4x1xf32>
    %33 = tpu.reciprocal %32 {approx = true} : vector<4x1xf32> -> vector<4x1xf32>
    %34 = vector.broadcast %33 : vector<4x1xf32> to vector<4x256xf32>
    %35 = arith.mulf %30, %34 : vector<4x256xf32>
    %36 = arith.mulf %35, %16 : vector<4x256xf32>
    %37 = arith.mulf %6, %8 : vector<4x256xf32>
    %cst_23 = arith.constant 1.000000e+00 : f32
    %38 = vector.broadcast %cst_23 : f32 to vector<4x256xf32>
    %39 = arith.subf %38, %8 : vector<4x256xf32>
    %40 = vector.broadcast %0 : f32 to vector<4x256xf32>
    %41 = arith.mulf %40, %39 : vector<4x256xf32>
    %42 = arith.mulf %41, %36 : vector<4x256xf32>
    %43 = arith.addf %37, %42 : vector<4x256xf32>
    %c0_24 = arith.constant 0 : index
    %c0_25 = arith.constant 0 : index
    %c0_26 = arith.constant 0 : index
    %44 = vector.load %arg9[%c0_24, %c0_25, %c0_26] : memref<2x4x256xf32, #tpu.memory_space<vmem>>, vector<1x4x256xf32>
    %45 = vector.shape_cast %44 : vector<1x4x256xf32> to vector<4x256xf32>
    %46 = vector.shape_cast %43 : vector<4x256xf32> to vector<1x4x256xf32>
    tpu.vector_store %arg9[%c0_24, %c0_25, %c0_26], %46 {strides = array<i32>} : memref<2x4x256xf32, #tpu.memory_space<vmem>>, vector<1x4x256xf32>,
    %c1 = arith.constant 1 : index
    %c0_27 = arith.constant 0 : index
    %c0_28 = arith.constant 0 : index
    %47 = vector.load %arg1[%c1, %c0_27, %c0_28] : memref<2x4x256xf32, #tpu.memory_space<vmem>>, vector<1x4x256xf32>
    %48 = vector.shape_cast %47 : vector<1x4x256xf32> to vector<4x256xf32>
    %c1_29 = arith.constant 1 : index
    %c0_30 = arith.constant 0 : index
    %c0_31 = arith.constant 0 : index
    %49 = vector.load %arg3[%c1_29, %c0_30, %c0_31] : memref<2x4x256xf32, #tpu.memory_space<vmem>>, vector<1x4x256xf32>
    %50 = vector.shape_cast %49 : vector<1x4x256xf32> to vector<4x256xf32>
    %c1_32 = arith.constant 1 : index
    %c0_33 = arith.constant 0 : index
    %c0_34 = arith.constant 0 : index
    %51 = vector.load %arg2[%c1_32, %c0_33, %c0_34] : memref<2x256x4xbf16, #tpu.memory_space<vmem>>, vector<1x256x4xbf16>
    %52 = vector.shape_cast %51 : vector<1x256x4xbf16> to vector<256x4xbf16>
    %53 = arith.truncf %48 : vector<4x256xf32> to vector<4x256xbf16>
    %cst_35 = arith.constant dense<0.000000e+00> : vector<8x256xf32>
    %54 = tpu.matmul %1, %53, %cst_35 {dimension_numbers = #tpu.dot_dimension_numbers<[1], [0], [0], [1], [0, 0, 1, 1], [], []>} : vector<8x4xbf16>, vector<4x256xbf16>, vector<8x256xf32> -> vector<8x256xf32>
    %55 = vector.broadcast %3 : vector<8x1xf32> to vector<8x256xf32>
    %56 = arith.addf %54, %55 : vector<8x256xf32>
    %57 = vector.extract_strided_slice %56 {offsets = [0, 0], sizes = [4, 256], strides = [1, 1]} : vector<8x256xf32> to vector<4x256xf32>
    %58 = vector.extract_strided_slice %56 {offsets = [4, 0], sizes = [4, 256], strides = [1, 1]} : vector<8x256xf32> to vector<4x256xf32>
    %cst_36 = arith.constant dense<0.000000e+00> : vector<256x4xf32>
    %59 = tpu.matmul %52, %2, %cst_36 {dimension_numbers = #tpu.dot_dimension_numbers<[1], [0], [0], [1], [0, 0, 1, 1], [], []>} : vector<256x4xbf16>, vector<4x4xbf16>, vector<256x4xf32> -> vector<256x4xf32>
    %60 = vector.broadcast %4 : vector<1x4xf32> to vector<256x4xf32>
    %61 = arith.addf %59, %60 : vector<256x4xf32>
    %62 = arith.truncf %57 : vector<4x256xf32> to vector<4x256xbf16>
    %63 = arith.truncf %61 : vector<256x4xf32> to vector<256x4xbf16>
    %cst_37 = arith.constant dense<0.000000e+00> : vector<4x4xf32>
    %64 = tpu.matmul %62, %63, %cst_37 {dimension_numbers = #tpu.dot_dimension_numbers<[1], [0], [0], [1], [0, 0, 1, 1], [], []>} : vector<4x256xbf16>, vector<256x4xbf16>, vector<4x4xf32> -> vector<4x4xf32>
    %65 = arith.truncf %64 : vector<4x4xf32> to vector<4x4xbf16>
    %66 = arith.truncf %50 : vector<4x256xf32> to vector<4x256xbf16>
    %cst_38 = arith.constant dense<0.000000e+00> : vector<4x256xf32>
    %67 = tpu.matmul %65, %66, %cst_38 {dimension_numbers = #tpu.dot_dimension_numbers<[1], [0], [0], [1], [0, 0, 1, 1], [], []>} : vector<4x4xbf16>, vector<4x256xbf16>, vector<4x256xf32> -> vector<4x256xf32>
    %cst_39 = arith.constant dense<0xFF800000> : vector<4xf32>
    %68 = vector.multi_reduction <maximumf>, %67, %cst_39 [1] : vector<4x256xf32> to vector<4xf32>
    %69 = vector.shape_cast %68 : vector<4xf32> to vector<4x1xf32>
    %70 = vector.broadcast %69 : vector<4x1xf32> to vector<4x256xf32>
    %71 = arith.subf %67, %70 : vector<4x256xf32>
    %72 = math.exp %71 : vector<4x256xf32>
    %cst_40 = arith.constant dense<0.000000e+00> : vector<4xf32>
    %73 = vector.multi_reduction <add>, %72, %cst_40 [1] : vector<4x256xf32> to vector<4xf32>
    %74 = vector.shape_cast %73 : vector<4xf32> to vector<4x1xf32>
    %75 = tpu.reciprocal %74 {approx = true} : vector<4x1xf32> -> vector<4x1xf32>
    %76 = vector.broadcast %75 : vector<4x1xf32> to vector<4x256xf32>
    %77 = arith.mulf %72, %76 : vector<4x256xf32>
    %78 = arith.mulf %77, %58 : vector<4x256xf32>
    %79 = arith.mulf %48, %50 : vector<4x256xf32>
    %cst_41 = arith.constant 1.000000e+00 : f32
    %80 = vector.broadcast %cst_41 : f32 to vector<4x256xf32>
    %81 = arith.subf %80, %50 : vector<4x256xf32>
    %82 = vector.broadcast %0 : f32 to vector<4x256xf32>
    %83 = arith.mulf %82, %81 : vector<4x256xf32>
    %84 = arith.mulf %83, %78 : vector<4x256xf32>
    %85 = arith.addf %79, %84 : vector<4x256xf32>
    %c1_42 = arith.constant 1 : index
    %c0_43 = arith.constant 0 : index
    %c0_44 = arith.constant 0 : index
    %86 = vector.load %arg9[%c1_42, %c0_43, %c0_44] : memref<2x4x256xf32, #tpu.memory_space<vmem>>, vector<1x4x256xf32>
    %87 = vector.shape_cast %86 : vector<1x4x256xf32> to vector<4x256xf32>
    %88 = vector.shape_cast %85 : vector<4x256xf32> to vector<1x4x256xf32>
    tpu.vector_store %arg9[%c1_42, %c0_43, %c0_44], %88 {strides = array<i32>} : memref<2x4x256xf32, #tpu.memory_space<vmem>>, vector<1x4x256xf32>,
    return
  }
  func.func @transform_0(%arg0: i32) -> (i32, i32, i32) {
    %c0_i32 = arith.constant 0 : i32
    %c0_i32_0 = arith.constant 0 : i32
    %c0_i32_1 = arith.constant 0 : i32
    return %arg0, %c0_i32, %c0_i32_0 : i32, i32, i32
  }
  func.func @transform_1(%arg0: i32) -> (i32, i32, i32) {
    %c0_i32 = arith.constant 0 : i32
    %c0_i32_0 = arith.constant 0 : i32
    %c0_i32_1 = arith.constant 0 : i32
    return %arg0, %c0_i32, %c0_i32_0 : i32, i32, i32
  }
  func.func @transform_2(%arg0: i32) -> (i32, i32, i32) {
    %c0_i32 = arith.constant 0 : i32
    %c0_i32_0 = arith.constant 0 : i32
    %c0_i32_1 = arith.constant 0 : i32
    return %arg0, %c0_i32, %c0_i32_0 : i32, i32, i32
  }
  func.func @transform_3(%arg0: i32) -> (i32, i32) {
    %c0_i32 = arith.constant 0 : i32
    %c0_i32_0 = arith.constant 0 : i32
    %c0_i32_1 = arith.constant 0 : i32
    return %c0_i32, %c0_i32_0 : i32, i32
  }
  func.func @transform_4(%arg0: i32) -> (i32, i32) {
    %c0_i32 = arith.constant 0 : i32
    %c0_i32_0 = arith.constant 0 : i32
    %c0_i32_1 = arith.constant 0 : i32
    return %c0_i32, %c0_i32_0 : i32, i32
  }
  func.func @transform_5(%arg0: i32) -> (i32, i32) {
    %c0_i32 = arith.constant 0 : i32
    %c0_i32_0 = arith.constant 0 : i32
    %c0_i32_1 = arith.constant 0 : i32
    return %c0_i32, %c0_i32_0 : i32, i32
  }
  func.func @transform_6(%arg0: i32) -> (i32, i32) {
    %c0_i32 = arith.constant 0 : i32
    %c0_i32_0 = arith.constant 0 : i32
    %c0_i32_1 = arith.constant 0 : i32
    return %c0_i32, %c0_i32_0 : i32, i32
  }
  func.func @transform_7(%arg0: i32) -> (i32, i32) {
    %c0_i32 = arith.constant 0 : i32
    %c0_i32_0 = arith.constant 0 : i32
    %c0_i32_1 = arith.constant 0 : i32
    return %c0_i32, %c0_i32_0 : i32, i32
  }
  func.func @transform_8(%arg0: i32) -> (i32, i32, i32) {
    %c0_i32 = arith.constant 0 : i32
    %c0_i32_0 = arith.constant 0 : i32
    %c0_i32_1 = arith.constant 0 : i32
    return %arg0, %c0_i32, %c0_i32_0 : i32, i32, i32
  }
}

</mosaic_0001>

<llo_original>
// kernel: tpu_custom_call.1
$region0: #{tpu_custom_call.1}
  #allocation0 [shape = 'u32[]', space=smem, size = 0x4, offset = 0x4, fixed_abs, tag = 'smem constant byte address 0x4 - core index']
  #allocation1 [shape = 'u32[144,128]{1,0:T(1,128)}', space=vmem, size = 0x12000, scoped, tag = 'internal scratch']
  #allocation2 [shape = 'f32[1,1]{1,0:T(1,128)S(6)}', space=smem, size = 0x200, scoped, tag = 'scoped memory for tpu_custom_call.1']
  %s0 = inlined_call_operand.vmem [shape: f32[2,4,256], index: 0, kind: input, shape index: {}]
  %s1 = inlined_call_operand.vmem [shape: bf16[2,256,4], index: 1, kind: input, shape index: {}]
  %s2 = inlined_call_operand.vmem [shape: f32[2,4,256], index: 2, kind: input, shape index: {}]
  %s3 = inlined_call_operand.vmem [shape: bf16[8,4], index: 3, kind: input, shape index: {}]
  %s4 = inlined_call_operand.vmem [shape: f32[8,1], index: 4, kind: input, shape index: {}]
  %s5 = inlined_call_operand.vmem [shape: bf16[4,4], index: 5, kind: input, shape index: {}]
  %s6 = inlined_call_operand.vmem [shape: f32[1,4], index: 6, kind: input, shape index: {}]
  %s7 = inlined_call_operand.<no memory space> [shape: f32[1,1], index: 7, kind: input, shape index: {}]
  %s8 = inlined_call_operand.hbm [shape: f32[2,4,256], index: 8, kind: output, shape index: {}]
  %s9 = sld [smem:[#allocation0]]
  $region42: #{tpu_custom_call.1} parent=0
    _
  %s11 = ssub.s32 1, %s9
  %s12 = scalar_select 0, %s11, %s9
  %13 = sst [smem:[#allocation2]] %s7
  $region1: #{tpu_custom_call.1} parent=0
    #allocation3 [shape = 'u8[8192]{0}', space=vmem, size = 0x2000, scoped, tag = 'output window, operand 0, single buffered']
    #allocation4 [shape = 's32[1]{0}', space=sflag, size = 0x4, scoped, tag = 'scoped memory for tpu_custom_call.1']
    %14 = vsyncpa [#allocation4], 0
    // Predicated region
    $region2: #{tpu_custom_call.1} parent=1 // pred_check
      _
    $region3: #{tpu_custom_call.1} parent=1 // pred_check_branch
      %16 = sbr.rel (0) target = $region5
    $region4: #{tpu_custom_call.1} parent=1 // pred_region
      _
    $region5: #{tpu_custom_call.1} parent=1 // pred_fallthru
      _
    // Predicated region
    $region6: #{tpu_custom_call.1} parent=1 // pred_check
      _
    $region7: #{tpu_custom_call.1} parent=1 // pred_check_branch
      %18 = sbr.rel (0) target = $region9
    $region8: #{tpu_custom_call.1} parent=1 // pred_region
      _
    $region9: #{tpu_custom_call.1} parent=1 // pred_fallthru
      _
    // Predicated region
    $region10: #{tpu_custom_call.1} parent=1 // pred_check
      _
    $region11: #{tpu_custom_call.1} parent=1 // pred_check_branch
      %20 = sbr.rel (0) target = $region13
    $region12: #{tpu_custom_call.1} parent=1 // pred_region
      _
    $region13: #{tpu_custom_call.1} parent=1 // pred_fallthru
      _
    // Predicated region
    $region14: #{tpu_custom_call.1} parent=1 // pred_check
      _
    $region15: #{tpu_custom_call.1} parent=1 // pred_check_branch
      %22 = sbr.rel (0) target = $region17
    $region16: #{tpu_custom_call.1} parent=1 // pred_region
      _
    $region17: #{tpu_custom_call.1} parent=1 // pred_fallthru
      _
    // Predicated region
    $region18: #{tpu_custom_call.1} parent=1 // pred_check
      _
    $region19: #{tpu_custom_call.1} parent=1 // pred_check_branch
      %24 = sbr.rel (0) target = $region21
    $region20: #{tpu_custom_call.1} parent=1 // pred_region
      _
    $region21: #{tpu_custom_call.1} parent=1 // pred_fallthru
      _
    // Predicated region
    $region22: #{tpu_custom_call.1} parent=1 // pred_check
      _
    $region23: #{tpu_custom_call.1} parent=1 // pred_check_branch
      %26 = sbr.rel (0) target = $region25
    $region24: #{tpu_custom_call.1} parent=1 // pred_region
      _
    $region25: #{tpu_custom_call.1} parent=1 // pred_fallthru
      _
    // Predicated region
    $region26: #{tpu_custom_call.1} parent=1 // pred_check
      _
    $region27: #{tpu_custom_call.1} parent=1 // pred_check_branch
      %28 = sbr.rel (0) target = $region29
    $region28: #{tpu_custom_call.1} parent=1 // pred_region
      _
    $region29: #{tpu_custom_call.1} parent=1 // pred_fallthru
      _
    // Predicated region
    $region30: #{tpu_custom_call.1} parent=1 // pred_check
      _
    $region31: #{tpu_custom_call.1} parent=1 // pred_check_branch
      %30 = sbr.rel (0) target = $region33
    $region32: #{tpu_custom_call.1} parent=1 // pred_region
      _
    $region33: #{tpu_custom_call.1} parent=1 // pred_fallthru
      _
    %s32 = sld [smem:[#allocation2]]
    %v33 = vld [vmem:[%s3] sm:$0xf]
    %v34 = vld [vmem:[%s5] sm:$0x3]
    %v35 = vld [vmem:[%s4] sm:$0xff]
    %v36 = vld [vmem:[%s6] sm:$0x1]
    %v37 = vld [vmem:[%s0] sm:$0xff]
    %v38 = vld [vmem:[%s2] sm:$0xff]
    %v39 = vld [vmem:[%s1] sm:$0xf]
    %v40 = vld [vmem:[%s1 + $0x4] sm:$0xf]
    %v41 = vld [vmem:[%s1 + $0x8] sm:$0xf]
    %v42 = vld [vmem:[%s1 + $0xc] sm:$0xf]
    %v43 = vld [vmem:[%s1 + $0x10] sm:$0xf]
    %v44 = vld [vmem:[%s1 + $0x14] sm:$0xf]
    %v45 = vld [vmem:[%s1 + $0x18] sm:$0xf]
    %v46 = vld [vmem:[%s1 + $0x1c] sm:$0xf]
    %v47 = vld [vmem:[%s1 + $0x20] sm:$0xf]
    %v48 = vld [vmem:[%s1 + $0x24] sm:$0xf]
    %v49 = vld [vmem:[%s1 + $0x28] sm:$0xf]
    %v50 = vld [vmem:[%s1 + $0x2c] sm:$0xf]
    %v51 = vld [vmem:[%s1 + $0x30] sm:$0xf]
    %v52 = vld [vmem:[%s1 + $0x34] sm:$0xf]
    %v53 = vld [vmem:[%s1 + $0x38] sm:$0xf]
    %v54 = vld [vmem:[%s1 + $0x3c] sm:$0xf]
    %v55 = vld [vmem:[%s1 + $0x40] sm:$0xf]
    %v56 = vld [vmem:[%s1 + $0x44] sm:$0xf]
    %v57 = vld [vmem:[%s1 + $0x48] sm:$0xf]
    %v58 = vld [vmem:[%s1 + $0x4c] sm:$0xf]
    %v59 = vld [vmem:[%s1 + $0x50] sm:$0xf]
    %v60 = vld [vmem:[%s1 + $0x54] sm:$0xf]
    %v61 = vld [vmem:[%s1 + $0x58] sm:$0xf]
    %v62 = vld [vmem:[%s1 + $0x5c] sm:$0xf]
    %v63 = vld [vmem:[%s1 + $0x60] sm:$0xf]
    %v64 = vld [vmem:[%s1 + $0x64] sm:$0xf]
    %v65 = vld [vmem:[%s1 + $0x68] sm:$0xf]
    %v66 = vld [vmem:[%s1 + $0x6c] sm:$0xf]
    %v67 = vld [vmem:[%s1 + $0x70] sm:$0xf]
    %v68 = vld [vmem:[%s1 + $0x74] sm:$0xf]
    %v69 = vld [vmem:[%s1 + $0x78] sm:$0xf]
    %v70 = vld [vmem:[%s1 + $0x7c] sm:$0xf]
    %v72 = vcombine.high %v37, %v37
    %v74 = vpack.c.bf16 %v37, %v37
    %v75 = vpack.c.bf16 %v72, %v72
    %77 = vset.pattern.permute.xlu0 0
    %78 = vperm.xlu0 %77, %v35
    %v79 = vpop.permute.xlu0 %78
    %vm81 = vcmask 31744
    %v83 = vsel %vm81, %v33, 0
    %vm85 = vcmask 1041408
    %v87 = vsel %vm85, %v74, 0
    %v90 = vsel %vm85, %v75, 0
    %92 = vmatprep.subr.bf16.mxu0 %v90
    %93 = vmatpush1.bf16.msra.mxu0 %v87
    %94 = vmatprep.subr.bf16.mxu0 0
    %95 = vmatpush1.bf16.msra.mxu0 0
    %96 = vmatprep.subr.bf16.mxu0 0
    %97 = vmatpush1.bf16.msra.mxu0 0
    %98 = vmatprep.subr.bf16.mxu0 0
    %99 = vmatpush1.bf16.msra.mxu0 0
    %100 = vmatprep.subr.bf16.mxu0 0
    %101 = vmatpush1.bf16.msra.mxu0 0
    %102 = vmatprep.subr.bf16.mxu0 0
    %103 = vmatpush1.bf16.msra.mxu0 0
    %104 = vmatprep.subr.bf16.mxu0 0
    %105 = vmatpush1.bf16.msra.mxu0 0
    %106 = vmatprep.subr.bf16.mxu0 0
    %107 = vmatpush1.bf16.msra.mxu0 0
    %108 = vmatprep.subr.bf16.mxu0 0
    %109 = vmatpush1.bf16.msra.mxu0 0
    %110 = vmatprep.subr.bf16.mxu0 0
    %111 = vmatpush1.bf16.msra.mxu0 0
    %112 = vmatprep.subr.bf16.mxu0 0
    %113 = vmatpush1.bf16.msra.mxu0 0
    %114 = vmatprep.subr.bf16.mxu0 0
    %115 = vmatpush1.bf16.msra.mxu0 0
    %116 = vmatprep.subr.bf16.mxu0 0
    %117 = vmatpush1.bf16.msra.mxu0 0
    %118 = vmatprep.subr.bf16.mxu0 0
    %119 = vmatpush1.bf16.msra.mxu0 0
    %120 = vmatprep.subr.bf16.mxu0 0
    %121 = vmatpush1.bf16.msra.mxu0 0
    %122 = vmatprep.subr.bf16.mxu0 0
    %123 = vmatpush1.bf16.msra.mxu0 0
    %124 = vmatprep.mubr.bf16.mxu0 0
    %125 = vmatmul.mubr.bf16.gmra.mrb[0].mxu0 %v83
    %v126 = vpop.f32.mrb[0].mxu0
    %v127 = vadd.f32 %v79, %v126
    %v128 = vpop.f32.mrb[0].mxu0
    %v129 = vadd.f32 %v79, %v128
    %v130 = vpop.f32.mrb[0].mxu0
    %v131 = vpop.f32.mrb[0].mxu0
    %132 = vdwg.mxu0
    %v134 = vlaneseq
    %v135 = vshrl.u32 %v134, 7
    %v136 = vsub.s32 0, %v135
    %v137 = vrot.slane %v36, %v136
    %v171 = vunpack.c.l.b16 %v39
    %v172 = vunpack.c.l.b16 %v40
    %v173 = vunpack.c.l.b16 %v41
    %v174 = vunpack.c.l.b16 %v42
    %v175 = vunpack.c.l.b16 %v43
    %v176 = vunpack.c.l.b16 %v44
    %v177 = vunpack.c.l.b16 %v45
    %v178 = vunpack.c.l.b16 %v46
    %v179 = vunpack.c.l.b16 %v47
    %v180 = vunpack.c.l.b16 %v48
    %v181 = vunpack.c.l.b16 %v49
    %v182 = vunpack.c.l.b16 %v50
    %v183 = vunpack.c.l.b16 %v51
    %v184 = vunpack.c.l.b16 %v52
    %v185 = vunpack.c.l.b16 %v53
    %v186 = vunpack.c.l.b16 %v54
    %v187 = vunpack.c.l.b16 %v55
    %v188 = vunpack.c.l.b16 %v56
    %v189 = vunpack.c.l.b16 %v57
    %v190 = vunpack.c.l.b16 %v58
    %v191 = vunpack.c.l.b16 %v59
    %v192 = vunpack.c.l.b16 %v60
    %v193 = vunpack.c.l.b16 %v61
    %v194 = vunpack.c.l.b16 %v62
    %v195 = vunpack.c.l.b16 %v63
    %v196 = vunpack.c.l.b16 %v64
    %v197 = vunpack.c.l.b16 %v65
    %v198 = vunpack.c.l.b16 %v66
    %v199 = vunpack.c.l.b16 %v67
    %v200 = vunpack.c.l.b16 %v68
    %v201 = vunpack.c.l.b16 %v69
    %v202 = vunpack.c.l.b16 %v70
    %v203 = vpack.c.b16 %v172, %v171
    %v204 = vpack.c.b16 %v174, %v173
    %v205 = vpack.c.b16 %v176, %v175
    %v206 = vpack.c.b16 %v178, %v177
    %v207 = vpack.c.b16 %v180, %v179
    %v208 = vpack.c.b16 %v182, %v181
    %v209 = vpack.c.b16 %v184, %v183
    %v210 = vpack.c.b16 %v186, %v185
    %v211 = vpack.c.b16 %v188, %v187
    %v212 = vpack.c.b16 %v190, %v189
    %v213 = vpack.c.b16 %v192, %v191
    %v214 = vpack.c.b16 %v194, %v193
    %v215 = vpack.c.b16 %v196, %v195
    %v216 = vpack.c.b16 %v198, %v197
    %v217 = vpack.c.b16 %v200, %v199
    %v218 = vpack.c.b16 %v202, %v201
    %v220 = vsel %vm81, %v203, 0
    %v223 = vsel %vm81, %v204, 0
    %v226 = vsel %vm81, %v205, 0
    %v229 = vsel %vm81, %v206, 0
    %v232 = vsel %vm81, %v207, 0
    %v235 = vsel %vm81, %v208, 0
    %v238 = vsel %vm81, %v209, 0
    %v241 = vsel %vm81, %v210, 0
    %v244 = vsel %vm81, %v211, 0
    %v247 = vsel %vm81, %v212, 0
    %v250 = vsel %vm81, %v213, 0
    %v253 = vsel %vm81, %v214, 0
    %v256 = vsel %vm81, %v215, 0
    %v259 = vsel %vm81, %v216, 0
    %v262 = vsel %vm81, %v217, 0
    %v265 = vsel %vm81, %v218, 0
    %v268 = vsel %vm85, %v34, 0
    %270 = vmatprep.subr.bf16.mxu0 0
    %271 = vmatpush1.bf16.msra.mxu0 %v268
    %272 = vmatprep.subr.bf16.mxu0 0
    %273 = vmatpush1.bf16.msra.mxu0 0
    %274 = vmatprep.subr.bf16.mxu0 0
    %275 = vmatpush1.bf16.msra.mxu0 0
    %276 = vmatprep.subr.bf16.mxu0 0
    %277 = vmatpush1.bf16.msra.mxu0 0
    %278 = vmatprep.subr.bf16.mxu0 0
    %279 = vmatpush1.bf16.msra.mxu0 0
    %280 = vmatprep.subr.bf16.mxu0 0
    %281 = vmatpush1.bf16.msra.mxu0 0
    %282 = vmatprep.subr.bf16.mxu0 0
    %283 = vmatpush1.bf16.msra.mxu0 0
    %284 = vmatprep.subr.bf16.mxu0 0
    %285 = vmatpush1.bf16.msra.mxu0 0
    %286 = vmatprep.subr.bf16.mxu0 0
    %287 = vmatpush1.bf16.msra.mxu0 0
    %288 = vmatprep.subr.bf16.mxu0 0
    %289 = vmatpush1.bf16.msra.mxu0 0
    %290 = vmatprep.subr.bf16.mxu0 0
    %291 = vmatpush1.bf16.msra.mxu0 0
    %292 = vmatprep.subr.bf16.mxu0 0
    %293 = vmatpush1.bf16.msra.mxu0 0
    %294 = vmatprep.subr.bf16.mxu0 0
    %295 = vmatpush1.bf16.msra.mxu0 0
    %296 = vmatprep.subr.bf16.mxu0 0
    %297 = vmatpush1.bf16.msra.mxu0 0
    %298 = vmatprep.subr.bf16.mxu0 0
    %299 = vmatpush1.bf16.msra.mxu0 0
    %300 = vmatprep.subr.bf16.mxu0 0
    %301 = vmatpush1.bf16.msra.mxu0 0
    %302 = vmatprep.mubr.bf16.mxu0 0
    %303 = vmatmul.mubr.bf16.gmra.mrb[0].mxu0 %v220
    %v304 = vpop.f32.mrb[0].mxu0
    %v305 = vadd.f32 %v137, %v304
    %v306 = vpop.f32.mrb[0].mxu0
    %v307 = vpop.f32.mrb[0].mxu0
    %v308 = vadd.f32 %v137, %v307
    %v309 = vpop.f32.mrb[0].mxu0
    %310 = vmatprep.mubr.bf16.mxu0 0
    %311 = vmatmul.mubr.bf16.gmra.mrb[0].mxu0 %v223
    %v312 = vpop.f32.mrb[0].mxu0
    %v313 = vadd.f32 %v137, %v312
    %v314 = vpop.f32.mrb[0].mxu0
    %v315 = vpop.f32.mrb[0].mxu0
    %v316 = vadd.f32 %v137, %v315
    %v317 = vpop.f32.mrb[0].mxu0
    %318 = vmatprep.mubr.bf16.mxu0 0
    %319 = vmatmul.mubr.bf16.gmra.mrb[0].mxu0 %v226
    %v320 = vpop.f32.mrb[0].mxu0
    %v321 = vadd.f32 %v137, %v320
    %v322 = vpop.f32.mrb[0].mxu0
    %v323 = vpop.f32.mrb[0].mxu0
    %v324 = vadd.f32 %v137, %v323
    %v325 = vpop.f32.mrb[0].mxu0
    %326 = vmatprep.mubr.bf16.mxu0 0
    %327 = vmatmul.mubr.bf16.gmra.mrb[0].mxu0 %v229
    %v328 = vpop.f32.mrb[0].mxu0
    %v329 = vadd.f32 %v137, %v328
    %v330 = vpop.f32.mrb[0].mxu0
    %v331 = vpop.f32.mrb[0].mxu0
    %v332 = vadd.f32 %v137, %v331
    %v333 = vpop.f32.mrb[0].mxu0
    %334 = vmatprep.mubr.bf16.mxu0 0
    %335 = vmatmul.mubr.bf16.gmra.mrb[0].mxu0 %v232
    %v336 = vpop.f32.mrb[0].mxu0
    %v337 = vadd.f32 %v137, %v336
    %v338 = vpop.f32.mrb[0].mxu0
    %v339 = vpop.f32.mrb[0].mxu0
    %v340 = vadd.f32 %v137, %v339
    %v341 = vpop.f32.mrb[0].mxu0
    %342 = vmatprep.mubr.bf16.mxu0 0
    %343 = vmatmul.mubr.bf16.gmra.mrb[0].mxu0 %v235
    %v344 = vpop.f32.mrb[0].mxu0
    %v345 = vadd.f32 %v137, %v344
    %v346 = vpop.f32.mrb[0].mxu0
    %v347 = vpop.f32.mrb[0].mxu0
    %v348 = vadd.f32 %v137, %v347
    %v349 = vpop.f32.mrb[0].mxu0
    %350 = vmatprep.mubr.bf16.mxu0 0
    %351 = vmatmul.mubr.bf16.gmra.mrb[0].mxu0 %v238
    %v352 = vpop.f32.mrb[0].mxu0
    %v353 = vadd.f32 %v137, %v352
    %v354 = vpop.f32.mrb[0].mxu0
    %v355 = vpop.f32.mrb[0].mxu0
    %v356 = vadd.f32 %v137, %v355
    %v357 = vpop.f32.mrb[0].mxu0
    %358 = vmatprep.mubr.bf16.mxu0 0
    %359 = vmatmul.mubr.bf16.gmra.mrb[0].mxu0 %v241
    %v360 = vpop.f32.mrb[0].mxu0
    %v361 = vadd.f32 %v137, %v360
    %v362 = vpop.f32.mrb[0].mxu0
    %v363 = vpop.f32.mrb[0].mxu0
    %v364 = vadd.f32 %v137, %v363
    %v365 = vpop.f32.mrb[0].mxu0
    %366 = vmatprep.mubr.bf16.mxu0 0
    %367 = vmatmul.mubr.bf16.gmra.mrb[0].mxu0 %v244
    %v368 = vpop.f32.mrb[0].mxu0
    %v369 = vadd.f32 %v137, %v368
    %v370 = vpop.f32.mrb[0].mxu0
    %v371 = vpop.f32.mrb[0].mxu0
    %v372 = vadd.f32 %v137, %v371
    %v373 = vpop.f32.mrb[0].mxu0
    %374 = vmatprep.mubr.bf16.mxu0 0
    %375 = vmatmul.mubr.bf16.gmra.mrb[0].mxu0 %v247
    %v376 = vpop.f32.mrb[0].mxu0
    %v377 = vadd.f32 %v137, %v376
    %v378 = vpop.f32.mrb[0].mxu0
    %v379 = vpop.f32.mrb[0].mxu0
    %v380 = vadd.f32 %v137, %v379
    %v381 = vpop.f32.mrb[0].mxu0
    %382 = vmatprep.mubr.bf16.mxu0 0
    %383 = vmatmul.mubr.bf16.gmra.mrb[0].mxu0 %v250
    %v384 = vpop.f32.mrb[0].mxu0
    %v385 = vadd.f32 %v137, %v384
    %v386 = vpop.f32.mrb[0].mxu0
    %v387 = vpop.f32.mrb[0].mxu0
    %v388 = vadd.f32 %v137, %v387
    %v389 = vpop.f32.mrb[0].mxu0
    %390 = vmatprep.mubr.bf16.mxu0 0
    %391 = vmatmul.mubr.bf16.gmra.mrb[0].mxu0 %v253
    %v392 = vpop.f32.mrb[0].mxu0
    %v393 = vadd.f32 %v137, %v392
    %v394 = vpop.f32.mrb[0].mxu0
    %v395 = vpop.f32.mrb[0].mxu0
    %v396 = vadd.f32 %v137, %v395
    %v397 = vpop.f32.mrb[0].mxu0
    %398 = vmatprep.mubr.bf16.mxu0 0
    %399 = vmatmul.mubr.bf16.gmra.mrb[0].mxu0 %v256
    %v400 = vpop.f32.mrb[0].mxu0
    %v401 = vadd.f32 %v137, %v400
    %v402 = vpop.f32.mrb[0].mxu0
    %v403 = vpop.f32.mrb[0].mxu0
    %v404 = vadd.f32 %v137, %v403
    %v405 = vpop.f32.mrb[0].mxu0
    %406 = vmatprep.mubr.bf16.mxu0 0
    %407 = vmatmul.mubr.bf16.gmra.mrb[0].mxu0 %v259
    %v408 = vpop.f32.mrb[0].mxu0
    %v409 = vadd.f32 %v137, %v408
    %v410 = vpop.f32.mrb[0].mxu0
    %v411 = vpop.f32.mrb[0].mxu0
    %v412 = vadd.f32 %v137, %v411
    %v413 = vpop.f32.mrb[0].mxu0
    %414 = vmatprep.mubr.bf16.mxu0 0
    %415 = vmatmul.mubr.bf16.gmra.mrb[0].mxu0 %v262
    %v416 = vpop.f32.mrb[0].mxu0
    %v417 = vadd.f32 %v137, %v416
    %v418 = vpop.f32.mrb[0].mxu0
    %v419 = vpop.f32.mrb[0].mxu0
    %v420 = vadd.f32 %v137, %v419
    %v421 = vpop.f32.mrb[0].mxu0
    %422 = vmatprep.mubr.bf16.mxu0 0
    %423 = vmatmul.mubr.bf16.gmra.mrb[0].mxu0 %v265
    %v424 = vpop.f32.mrb[0].mxu0
    %v425 = vadd.f32 %v137, %v424
    %v426 = vpop.f32.mrb[0].mxu0
    %v427 = vpop.f32.mrb[0].mxu0
    %v428 = vadd.f32 %v137, %v427
    %v429 = vpop.f32.mrb[0].mxu0
    %430 = vdwg.mxu0
    %v431 = vpack.c.bf16 %v127, %v127
    %v432 = vpack.c.bf16 %v129, %v129
    %v433 = vpack.c.bf16 %v308, %v305
    %v434 = vpack.c.bf16 %v316, %v313
    %v435 = vpack.c.bf16 %v324, %v321
    %v436 = vpack.c.bf16 %v332, %v329
    %v437 = vpack.c.bf16 %v340, %v337
    %v438 = vpack.c.bf16 %v348, %v345
    %v439 = vpack.c.bf16 %v356, %v353
    %v440 = vpack.c.bf16 %v364, %v361
    %v441 = vpack.c.bf16 %v372, %v369
    %v442 = vpack.c.bf16 %v380, %v377
    %v443 = vpack.c.bf16 %v388, %v385
    %v444 = vpack.c.bf16 %v396, %v393
    %v445 = vpack.c.bf16 %v404, %v401
    %v446 = vpack.c.bf16 %v412, %v409
    %v447 = vpack.c.bf16 %v420, %v417
    %v448 = vpack.c.bf16 %v428, %v425
    %449 = vmatprep.subr.bf16.mxu0 0
    %450 = vmatpush1.bf16.msra.mxu0 %v433
    %451 = vmatprep.subr.bf16.mxu0 0
    %452 = vmatpush1.bf16.msra.mxu0 %v434
    %453 = vmatprep.subr.bf16.mxu0 0
    %454 = vmatpush1.bf16.msra.mxu0 %v435
    %455 = vmatprep.subr.bf16.mxu0 0
    %456 = vmatpush1.bf16.msra.mxu0 %v436
    %457 = vmatprep.subr.bf16.mxu0 0
    %458 = vmatpush1.bf16.msra.mxu0 %v437
    %459 = vmatprep.subr.bf16.mxu0 0
    %460 = vmatpush1.bf16.msra.mxu0 %v438
    %461 = vmatprep.subr.bf16.mxu0 0
    %462 = vmatpush1.bf16.msra.mxu0 %v439
    %463 = vmatprep.subr.bf16.mxu0 0
    %464 = vmatpush1.bf16.msra.mxu0 %v440
    %465 = vmatprep.subr.bf16.mxu0 0
    %466 = vmatpush1.bf16.msra.mxu0 %v441
    %467 = vmatprep.subr.bf16.mxu0 0
    %468 = vmatpush1.bf16.msra.mxu0 %v442
    %469 = vmatprep.subr.bf16.mxu0 0
    %470 = vmatpush1.bf16.msra.mxu0 %v443
    %471 = vmatprep.subr.bf16.mxu0 0
    %472 = vmatpush1.bf16.msra.mxu0 %v444
    %473 = vmatprep.subr.bf16.mxu0 0
    %474 = vmatpush1.bf16.msra.mxu0 %v445
    %475 = vmatprep.subr.bf16.mxu0 0
    %476 = vmatpush1.bf16.msra.mxu0 %v446
    %477 = vmatprep.subr.bf16.mxu0 0
    %478 = vmatpush1.bf16.msra.mxu0 %v447
    %479 = vmatprep.subr.bf16.mxu0 0
    %480 = vmatpush1.bf16.msra.mxu0 %v448
    %481 = vmatprep.mubr.bf16.mxu0 %v432
    %482 = vmatmul.mubr.bf16.gmra.mrb[0].mxu0 %v431
    %v483 = vpop.f32.mrb[0].mxu0
    %v484 = vadd.f32 0.0, %v483
    %v485 = vpop.f32.mrb[0].mxu0
    %v486 = vpop.f32.mrb[0].mxu0
    %v487 = vpop.f32.mrb[0].mxu0
    %488 = vdwg.mxu0
    %v489 = vpack.c.bf16 %v484, %v484
    %v491 = vcombine.high %v38, %v38
    %v493 = vpack.c.bf16 %v38, %v38
    %v494 = vpack.c.bf16 %v491, %v491
    %v496 = vsel %vm81, %v489, 0
    %v499 = vsel %vm85, %v493, 0
    %v502 = vsel %vm85, %v494, 0
    %504 = vmatprep.subr.bf16.mxu0 %v502
    %505 = vmatpush1.bf16.msra.mxu0 %v499
    %506 = vmatprep.subr.bf16.mxu0 0
    %507 = vmatpush1.bf16.msra.mxu0 0
    %508 = vmatprep.subr.bf16.mxu0 0
    %509 = vmatpush1.bf16.msra.mxu0 0
    %510 = vmatprep.subr.bf16.mxu0 0
    %511 = vmatpush1.bf16.msra.mxu0 0
    %512 = vmatprep.subr.bf16.mxu0 0
    %513 = vmatpush1.bf16.msra.mxu0 0
    %514 = vmatprep.subr.bf16.mxu0 0
    %515 = vmatpush1.bf16.msra.mxu0 0
    %516 = vmatprep.subr.bf16.mxu0 0
    %517 = vmatpush1.bf16.msra.mxu0 0
    %518 = vmatprep.subr.bf16.mxu0 0
    %519 = vmatpush1.bf16.msra.mxu0 0
    %520 = vmatprep.subr.bf16.mxu0 0
    %521 = vmatpush1.bf16.msra.mxu0 0
    %522 = vmatprep.subr.bf16.mxu0 0
    %523 = vmatpush1.bf16.msra.mxu0 0
    %524 = vmatprep.subr.bf16.mxu0 0
    %525 = vmatpush1.bf16.msra.mxu0 0
    %526 = vmatprep.subr.bf16.mxu0 0
    %527 = vmatpush1.bf16.msra.mxu0 0
    %528 = vmatprep.subr.bf16.mxu0 0
    %529 = vmatpush1.bf16.msra.mxu0 0
    %530 = vmatprep.subr.bf16.mxu0 0
    %531 = vmatpush1.bf16.msra.mxu0 0
    %532 = vmatprep.subr.bf16.mxu0 0
    %533 = vmatpush1.bf16.msra.mxu0 0
    %534 = vmatprep.subr.bf16.mxu0 0
    %535 = vmatpush1.bf16.msra.mxu0 0
    %536 = vmatprep.mubr.bf16.mxu0 0
    %537 = vmatmul.mubr.bf16.gmra.mrb[0].mxu0 %v496
    %v538 = vpop.f32.mrb[0].mxu0
    %v539 = vadd.f32 0.0, %v538
    %v540 = vpop.f32.mrb[0].mxu0
    %v541 = vadd.f32 0.0, %v540
    %v542 = vpop.f32.mrb[0].mxu0
    %v543 = vpop.f32.mrb[0].mxu0
    %544 = vdwg.mxu0
    %vm545 = vcmask 1043456
    %v546 = vsel %vm545, %v539, -inf
    %v547 = vsel %vm545, %v541, -inf
    %v548 = vmax.f32 %v546, %v547
    %549 = vmax.xlane.f32.xlu0 %v548
    %v550 = vpop.xlane.xlu0 %549
    %v551 = vsub.f32 %v539, %v550
    %v552 = vsub.f32 %v541, %v550
    %v553 = vmul.f32 %v551, 1.442695
    %v554 = vpow.pop %v553
    %v555 = vmul.f32 %v552, 1.442695
    %v556 = vpow.pop %v555
    %v557 = vsel %vm545, %v554, 0.0
    %v558 = vsel %vm545, %v556, 0.0
    %v559 = vadd.f32 %v557, %v558
    %560 = vadd.xlane.f32.xlu0 %v559
    %v561 = vpop.xlane.xlu0 %560
    %v562 = vrcp.pop %v561
    %v563 = vmul.f32 %v554, %v562
    %v564 = vmul.f32 %v556, %v562
    %v567 = vrot.slane %v127, 4
    %v568 = vrot.slane %v129, 4
    %v571 = vmul.f32 %v563, %v567
    %v572 = vmul.f32 %v564, %v568
    %v573 = vmul.f32 %v37, %v38
    %v574 = vsub.f32 1.0, %v38
    %v575 = vstv %s32
    %v576 = vmul.f32 %v575, %v574
    %v579 = vcombine.low %v571, %v572
    %v581 = vmul.f32 %v576, %v579
    %v582 = vadd.f32 %v573, %v581
    %583 = vst [vmem:[#allocation3] sm:$0xff] %v582
    %s584 = scalar_lea.vmem %s0, 8
    %v585 = vld [vmem:[%s584] sm:$0xff]
    %s586 = scalar_lea.vmem %s2, 8
    %v587 = vld [vmem:[%s586] sm:$0xff]
    %s588 = scalar_lea.vmem %s1, 128
    %v589 = vld [vmem:[%s588] sm:$0xf]
    %v590 = vld [vmem:[%s588 + $0x4] sm:$0xf]
    %v591 = vld [vmem:[%s588 + $0x8] sm:$0xf]
    %v592 = vld [vmem:[%s588 + $0xc] sm:$0xf]
    %v593 = vld [vmem:[%s588 + $0x10] sm:$0xf]
    %v594 = vld [vmem:[%s588 + $0x14] sm:$0xf]
    %v595 = vld [vmem:[%s588 + $0x18] sm:$0xf]
    %v596 = vld [vmem:[%s588 + $0x1c] sm:$0xf]
    %v597 = vld [vmem:[%s588 + $0x20] sm:$0xf]
    %v598 = vld [vmem:[%s588 + $0x24] sm:$0xf]
    %v599 = vld [vmem:[%s588 + $0x28] sm:$0xf]
    %v600 = vld [vmem:[%s588 + $0x2c] sm:$0xf]
    %v601 = vld [vmem:[%s588 + $0x30] sm:$0xf]
    %v602 = vld [vmem:[%s588 + $0x34] sm:$0xf]
    %v603 = vld [vmem:[%s588 + $0x38] sm:$0xf]
    %v604 = vld [vmem:[%s588 + $0x3c] sm:$0xf]
    %v605 = vld [vmem:[%s588 + $0x40] sm:$0xf]
    %v606 = vld [vmem:[%s588 + $0x44] sm:$0xf]
    %v607 = vld [vmem:[%s588 + $0x48] sm:$0xf]
    %v608 = vld [vmem:[%s588 + $0x4c] sm:$0xf]
    %v609 = vld [vmem:[%s588 + $0x50] sm:$0xf]
    %v610 = vld [vmem:[%s588 + $0x54] sm:$0xf]
    %v611 = vld [vmem:[%s588 + $0x58] sm:$0xf]
    %v612 = vld [vmem:[%s588 + $0x5c] sm:$0xf]
    %v613 = vld [vmem:[%s588 + $0x60] sm:$0xf]
    %v614 = vld [vmem:[%s588 + $0x64] sm:$0xf]
    %v615 = vld [vmem:[%s588 + $0x68] sm:$0xf]
    %v616 = vld [vmem:[%s588 + $0x6c] sm:$0xf]
    %v617 = vld [vmem:[%s588 + $0x70] sm:$0xf]
    %v618 = vld [vmem:[%s588 + $0x74] sm:$0xf]
    %v619 = vld [vmem:[%s588 + $0x78] sm:$0xf]
    %v620 = vld [vmem:[%s588 + $0x7c] sm:$0xf]
    %v622 = vcombine.high %v585, %v585
    %v624 = vpack.c.bf16 %v585, %v585
    %v625 = vpack.c.bf16 %v622, %v622
    %v627 = vsel %vm85, %v624, 0
    %v630 = vsel %vm85, %v625, 0
    %632 = vmatprep.subr.bf16.mxu0 %v630
    %633 = vmatpush1.bf16.msra.mxu0 %v627
    %634 = vmatprep.subr.bf16.mxu0 0
    %635 = vmatpush1.bf16.msra.mxu0 0
    %636 = vmatprep.subr.bf16.mxu0 0
    %637 = vmatpush1.bf16.msra.mxu0 0
    %638 = vmatprep.subr.bf16.mxu0 0
    %639 = vmatpush1.bf16.msra.mxu0 0
    %640 = vmatprep.subr.bf16.mxu0 0
    %641 = vmatpush1.bf16.msra.mxu0 0
    %642 = vmatprep.subr.bf16.mxu0 0
    %643 = vmatpush1.bf16.msra.mxu0 0
    %644 = vmatprep.subr.bf16.mxu0 0
    %645 = vmatpush1.bf16.msra.mxu0 0
    %646 = vmatprep.subr.bf16.mxu0 0
    %647 = vmatpush1.bf16.msra.mxu0 0
    %648 = vmatprep.subr.bf16.mxu0 0
    %649 = vmatpush1.bf16.msra.mxu0 0
    %650 = vmatprep.subr.bf16.mxu0 0
    %651 = vmatpush1.bf16.msra.mxu0 0
    %652 = vmatprep.subr.bf16.mxu0 0
    %653 = vmatpush1.bf16.msra.mxu0 0
    %654 = vmatprep.subr.bf16.mxu0 0
    %655 = vmatpush1.bf16.msra.mxu0 0
    %656 = vmatprep.subr.bf16.mxu0 0
    %657 = vmatpush1.bf16.msra.mxu0 0
    %658 = vmatprep.subr.bf16.mxu0 0
    %659 = vmatpush1.bf16.msra.mxu0 0
    %660 = vmatprep.subr.bf16.mxu0 0
    %661 = vmatpush1.bf16.msra.mxu0 0
    %662 = vmatprep.subr.bf16.mxu0 0
    %663 = vmatpush1.bf16.msra.mxu0 0
    %664 = vmatprep.mubr.bf16.mxu0 0
    %665 = vmatmul.mubr.bf16.gmra.mrb[0].mxu0 %v83
    %v666 = vpop.f32.mrb[0].mxu0
    %v667 = vadd.f32 %v79, %v666
    %v668 = vpop.f32.mrb[0].mxu0
    %v669 = vadd.f32 %v79, %v668
    %v670 = vpop.f32.mrb[0].mxu0
    %v671 = vpop.f32.mrb[0].mxu0
    %672 = vdwg.mxu0
    %v705 = vunpack.c.l.b16 %v589
    %v706 = vunpack.c.l.b16 %v590
    %v707 = vunpack.c.l.b16 %v591
    %v708 = vunpack.c.l.b16 %v592
    %v709 = vunpack.c.l.b16 %v593
    %v710 = vunpack.c.l.b16 %v594
    %v711 = vunpack.c.l.b16 %v595
    %v712 = vunpack.c.l.b16 %v596
    %v713 = vunpack.c.l.b16 %v597
    %v714 = vunpack.c.l.b16 %v598
    %v715 = vunpack.c.l.b16 %v599
    %v716 = vunpack.c.l.b16 %v600
    %v717 = vunpack.c.l.b16 %v601
    %v718 = vunpack.c.l.b16 %v602
    %v719 = vunpack.c.l.b16 %v603
    %v720 = vunpack.c.l.b16 %v604
    %v721 = vunpack.c.l.b16 %v605
    %v722 = vunpack.c.l.b16 %v606
    %v723 = vunpack.c.l.b16 %v607
    %v724 = vunpack.c.l.b16 %v608
    %v725 = vunpack.c.l.b16 %v609
    %v726 = vunpack.c.l.b16 %v610
    %v727 = vunpack.c.l.b16 %v611
    %v728 = vunpack.c.l.b16 %v612
    %v729 = vunpack.c.l.b16 %v613
    %v730 = vunpack.c.l.b16 %v614
    %v731 = vunpack.c.l.b16 %v615
    %v732 = vunpack.c.l.b16 %v616
    %v733 = vunpack.c.l.b16 %v617
    %v734 = vunpack.c.l.b16 %v618
    %v735 = vunpack.c.l.b16 %v619
    %v736 = vunpack.c.l.b16 %v620
    %v737 = vpack.c.b16 %v706, %v705
    %v738 = vpack.c.b16 %v708, %v707
    %v739 = vpack.c.b16 %v710, %v709
    %v740 = vpack.c.b16 %v712, %v711
    %v741 = vpack.c.b16 %v714, %v713
    %v742 = vpack.c.b16 %v716, %v715
    %v743 = vpack.c.b16 %v718, %v717
    %v744 = vpack.c.b16 %v720, %v719
    %v745 = vpack.c.b16 %v722, %v721
    %v746 = vpack.c.b16 %v724, %v723
    %v747 = vpack.c.b16 %v726, %v725
    %v748 = vpack.c.b16 %v728, %v727
    %v749 = vpack.c.b16 %v730, %v729
    %v750 = vpack.c.b16 %v732, %v731
    %v751 = vpack.c.b16 %v734, %v733
    %v752 = vpack.c.b16 %v736, %v735
    %v754 = vsel %vm81, %v737, 0
    %v757 = vsel %vm81, %v738, 0
    %v760 = vsel %vm81, %v739, 0
    %v763 = vsel %vm81, %v740, 0
    %v766 = vsel %vm81, %v741, 0
    %v769 = vsel %vm81, %v742, 0
    %v772 = vsel %vm81, %v743, 0
    %v775 = vsel %vm81, %v744, 0
    %v778 = vsel %vm81, %v745, 0
    %v781 = vsel %vm81, %v746, 0
    %v784 = vsel %vm81, %v747, 0
    %v787 = vsel %vm81, %v748, 0
    %v790 = vsel %vm81, %v749, 0
    %v793 = vsel %vm81, %v750, 0
    %v796 = vsel %vm81, %v751, 0
    %v799 = vsel %vm81, %v752, 0
    %801 = vmatprep.subr.bf16.mxu0 0
    %802 = vmatpush1.bf16.msra.mxu0 %v268
    %803 = vmatprep.subr.bf16.mxu0 0
    %804 = vmatpush1.bf16.msra.mxu0 0
    %805 = vmatprep.subr.bf16.mxu0 0
    %806 = vmatpush1.bf16.msra.mxu0 0
    %807 = vmatprep.subr.bf16.mxu0 0
    %808 = vmatpush1.bf16.msra.mxu0 0
    %809 = vmatprep.subr.bf16.mxu0 0
    %810 = vmatpush1.bf16.msra.mxu0 0
    %811 = vmatprep.subr.bf16.mxu0 0
    %812 = vmatpush1.bf16.msra.mxu0 0
    %813 = vmatprep.subr.bf16.mxu0 0
    %814 = vmatpush1.bf16.msra.mxu0 0
    %815 = vmatprep.subr.bf16.mxu0 0
    %816 = vmatpush1.bf16.msra.mxu0 0
    %817 = vmatprep.subr.bf16.mxu0 0
    %818 = vmatpush1.bf16.msra.mxu0 0
    %819 = vmatprep.subr.bf16.mxu0 0
    %820 = vmatpush1.bf16.msra.mxu0 0
    %821 = vmatprep.subr.bf16.mxu0 0
    %822 = vmatpush1.bf16.msra.mxu0 0
    %823 = vmatprep.subr.bf16.mxu0 0
    %824 = vmatpush1.bf16.msra.mxu0 0
    %825 = vmatprep.subr.bf16.mxu0 0
    %826 = vmatpush1.bf16.msra.mxu0 0
    %827 = vmatprep.subr.bf16.mxu0 0
    %828 = vmatpush1.bf16.msra.mxu0 0
    %829 = vmatprep.subr.bf16.mxu0 0
    %830 = vmatpush1.bf16.msra.mxu0 0
    %831 = vmatprep.subr.bf16.mxu0 0
    %832 = vmatpush1.bf16.msra.mxu0 0
    %833 = vmatprep.mubr.bf16.mxu0 0
    %834 = vmatmul.mubr.bf16.gmra.mrb[0].mxu0 %v754
    %v835 = vpop.f32.mrb[0].mxu0
    %v836 = vadd.f32 %v137, %v835
    %v837 = vpop.f32.mrb[0].mxu0
    %v838 = vpop.f32.mrb[0].mxu0
    %v839 = vadd.f32 %v137, %v838
    %v840 = vpop.f32.mrb[0].mxu0
    %841 = vmatprep.mubr.bf16.mxu0 0
    %842 = vmatmul.mubr.bf16.gmra.mrb[0].mxu0 %v757
    %v843 = vpop.f32.mrb[0].mxu0
    %v844 = vadd.f32 %v137, %v843
    %v845 = vpop.f32.mrb[0].mxu0
    %v846 = vpop.f32.mrb[0].mxu0
    %v847 = vadd.f32 %v137, %v846
    %v848 = vpop.f32.mrb[0].mxu0
    %849 = vmatprep.mubr.bf16.mxu0 0
    %850 = vmatmul.mubr.bf16.gmra.mrb[0].mxu0 %v760
    %v851 = vpop.f32.mrb[0].mxu0
    %v852 = vadd.f32 %v137, %v851
    %v853 = vpop.f32.mrb[0].mxu0
    %v854 = vpop.f32.mrb[0].mxu0
    %v855 = vadd.f32 %v137, %v854
    %v856 = vpop.f32.mrb[0].mxu0
    %857 = vmatprep.mubr.bf16.mxu0 0
    %858 = vmatmul.mubr.bf16.gmra.mrb[0].mxu0 %v763
    %v859 = vpop.f32.mrb[0].mxu0
    %v860 = vadd.f32 %v137, %v859
    %v861 = vpop.f32.mrb[0].mxu0
    %v862 = vpop.f32.mrb[0].mxu0
    %v863 = vadd.f32 %v137, %v862
    %v864 = vpop.f32.mrb[0].mxu0
    %865 = vmatprep.mubr.bf16.mxu0 0
    %866 = vmatmul.mubr.bf16.gmra.mrb[0].mxu0 %v766
    %v867 = vpop.f32.mrb[0].mxu0
    %v868 = vadd.f32 %v137, %v867
    %v869 = vpop.f32.mrb[0].mxu0
    %v870 = vpop.f32.mrb[0].mxu0
    %v871 = vadd.f32 %v137, %v870
    %v872 = vpop.f32.mrb[0].mxu0
    %873 = vmatprep.mubr.bf16.mxu0 0
    %874 = vmatmul.mubr.bf16.gmra.mrb[0].mxu0 %v769
    %v875 = vpop.f32.mrb[0].mxu0
    %v876 = vadd.f32 %v137, %v875
    %v877 = vpop.f32.mrb[0].mxu0
    %v878 = vpop.f32.mrb[0].mxu0
    %v879 = vadd.f32 %v137, %v878
    %v880 = vpop.f32.mrb[0].mxu0
    %881 = vmatprep.mubr.bf16.mxu0 0
    %882 = vmatmul.mubr.bf16.gmra.mrb[0].mxu0 %v772
    %v883 = vpop.f32.mrb[0].mxu0
    %v884 = vadd.f32 %v137, %v883
    %v885 = vpop.f32.mrb[0].mxu0
    %v886 = vpop.f32.mrb[0].mxu0
    %v887 = vadd.f32 %v137, %v886
    %v888 = vpop.f32.mrb[0].mxu0
    %889 = vmatprep.mubr.bf16.mxu0 0
    %890 = vmatmul.mubr.bf16.gmra.mrb[0].mxu0 %v775
    %v891 = vpop.f32.mrb[0].mxu0
    %v892 = vadd.f32 %v137, %v891
    %v893 = vpop.f32.mrb[0].mxu0
    %v894 = vpop.f32.mrb[0].mxu0
    %v895 = vadd.f32 %v137, %v894
    %v896 = vpop.f32.mrb[0].mxu0
    %897 = vmatprep.mubr.bf16.mxu0 0
    %898 = vmatmul.mubr.bf16.gmra.mrb[0].mxu0 %v778
    %v899 = vpop.f32.mrb[0].mxu0
    %v900 = vadd.f32 %v137, %v899
    %v901 = vpop.f32.mrb[0].mxu0
    %v902 = vpop.f32.mrb[0].mxu0
    %v903 = vadd.f32 %v137, %v902
    %v904 = vpop.f32.mrb[0].mxu0
    %905 = vmatprep.mubr.bf16.mxu0 0
    %906 = vmatmul.mubr.bf16.gmra.mrb[0].mxu0 %v781
    %v907 = vpop.f32.mrb[0].mxu0
    %v908 = vadd.f32 %v137, %v907
    %v909 = vpop.f32.mrb[0].mxu0
    %v910 = vpop.f32.mrb[0].mxu0
    %v911 = vadd.f32 %v137, %v910
    %v912 = vpop.f32.mrb[0].mxu0
    %913 = vmatprep.mubr.bf16.mxu0 0
    %914 = vmatmul.mubr.bf16.gmra.mrb[0].mxu0 %v784
    %v915 = vpop.f32.mrb[0].mxu0
    %v916 = vadd.f32 %v137, %v915
    %v917 = vpop.f32.mrb[0].mxu0
    %v918 = vpop.f32.mrb[0].mxu0
    %v919 = vadd.f32 %v137, %v918
    %v920 = vpop.f32.mrb[0].mxu0
    %921 = vmatprep.mubr.bf16.mxu0 0
    %922 = vmatmul.mubr.bf16.gmra.mrb[0].mxu0 %v787
    %v923 = vpop.f32.mrb[0].mxu0
    %v924 = vadd.f32 %v137, %v923
    %v925 = vpop.f32.mrb[0].mxu0
    %v926 = vpop.f32.mrb[0].mxu0
    %v927 = vadd.f32 %v137, %v926
    %v928 = vpop.f32.mrb[0].mxu0
    %929 = vmatprep.mubr.bf16.mxu0 0
    %930 = vmatmul.mubr.bf16.gmra.mrb[0].mxu0 %v790
    %v931 = vpop.f32.mrb[0].mxu0
    %v932 = vadd.f32 %v137, %v931
    %v933 = vpop.f32.mrb[0].mxu0
    %v934 = vpop.f32.mrb[0].mxu0
    %v935 = vadd.f32 %v137, %v934
    %v936 = vpop.f32.mrb[0].mxu0
    %937 = vmatprep.mubr.bf16.mxu0 0
    %938 = vmatmul.mubr.bf16.gmra.mrb[0].mxu0 %v793
    %v939 = vpop.f32.mrb[0].mxu0
    %v940 = vadd.f32 %v137, %v939
    %v941 = vpop.f32.mrb[0].mxu0
    %v942 = vpop.f32.mrb[0].mxu0
    %v943 = vadd.f32 %v137, %v942
    %v944 = vpop.f32.mrb[0].mxu0
    %945 = vmatprep.mubr.bf16.mxu0 0
    %946 = vmatmul.mubr.bf16.gmra.mrb[0].mxu0 %v796
    %v947 = vpop.f32.mrb[0].mxu0
    %v948 = vadd.f32 %v137, %v947
    %v949 = vpop.f32.mrb[0].mxu0
    %v950 = vpop.f32.mrb[0].mxu0
    %v951 = vadd.f32 %v137, %v950
    %v952 = vpop.f32.mrb[0].mxu0
    %953 = vmatprep.mubr.bf16.mxu0 0
    %954 = vmatmul.mubr.bf16.gmra.mrb[0].mxu0 %v799
    %v955 = vpop.f32.mrb[0].mxu0
    %v956 = vadd.f32 %v137, %v955
    %v957 = vpop.f32.mrb[0].mxu0
    %v958 = vpop.f32.mrb[0].mxu0
    %v959 = vadd.f32 %v137, %v958
    %v960 = vpop.f32.mrb[0].mxu0
    %961 = vdwg.mxu0
    %v962 = vpack.c.bf16 %v667, %v667
    %v963 = vpack.c.bf16 %v669, %v669
    %v964 = vpack.c.bf16 %v839, %v836
    %v965 = vpack.c.bf16 %v847, %v844
    %v966 = vpack.c.bf16 %v855, %v852
    %v967 = vpack.c.bf16 %v863, %v860
    %v968 = vpack.c.bf16 %v871, %v868
    %v969 = vpack.c.bf16 %v879, %v876
    %v970 = vpack.c.bf16 %v887, %v884
    %v971 = vpack.c.bf16 %v895, %v892
    %v972 = vpack.c.bf16 %v903, %v900
    %v973 = vpack.c.bf16 %v911, %v908
    %v974 = vpack.c.bf16 %v919, %v916
    %v975 = vpack.c.bf16 %v927, %v924
    %v976 = vpack.c.bf16 %v935, %v932
    %v977 = vpack.c.bf16 %v943, %v940
    %v978 = vpack.c.bf16 %v951, %v948
    %v979 = vpack.c.bf16 %v959, %v956
    %980 = vmatprep.subr.bf16.mxu0 0
    %981 = vmatpush1.bf16.msra.mxu0 %v964
    %982 = vmatprep.subr.bf16.mxu0 0
    %983 = vmatpush1.bf16.msra.mxu0 %v965
    %984 = vmatprep.subr.bf16.mxu0 0
    %985 = vmatpush1.bf16.msra.mxu0 %v966
    %986 = vmatprep.subr.bf16.mxu0 0
    %987 = vmatpush1.bf16.msra.mxu0 %v967
    %988 = vmatprep.subr.bf16.mxu0 0
    %989 = vmatpush1.bf16.msra.mxu0 %v968
    %990 = vmatprep.subr.bf16.mxu0 0
    %991 = vmatpush1.bf16.msra.mxu0 %v969
    %992 = vmatprep.subr.bf16.mxu0 0
    %993 = vmatpush1.bf16.msra.mxu0 %v970
    %994 = vmatprep.subr.bf16.mxu0 0
    %995 = vmatpush1.bf16.msra.mxu0 %v971
    %996 = vmatprep.subr.bf16.mxu0 0
    %997 = vmatpush1.bf16.msra.mxu0 %v972
    %998 = vmatprep.subr.bf16.mxu0 0
    %999 = vmatpush1.bf16.msra.mxu0 %v973
    %1000 = vmatprep.subr.bf16.mxu0 0
    %1001 = vmatpush1.bf16.msra.mxu0 %v974
    %1002 = vmatprep.subr.bf16.mxu0 0
    %1003 = vmatpush1.bf16.msra.mxu0 %v975
    %1004 = vmatprep.subr.bf16.mxu0 0
    %1005 = vmatpush1.bf16.msra.mxu0 %v976
    %1006 = vmatprep.subr.bf16.mxu0 0
    %1007 = vmatpush1.bf16.msra.mxu0 %v977
    %1008 = vmatprep.subr.bf16.mxu0 0
    %1009 = vmatpush1.bf16.msra.mxu0 %v978
    %1010 = vmatprep.subr.bf16.mxu0 0
    %1011 = vmatpush1.bf16.msra.mxu0 %v979
    %1012 = vmatprep.mubr.bf16.mxu0 %v963
    %1013 = vmatmul.mubr.bf16.gmra.mrb[0].mxu0 %v962
    %v1014 = vpop.f32.mrb[0].mxu0
    %v1015 = vadd.f32 0.0, %v1014
    %v1016 = vpop.f32.mrb[0].mxu0
    %v1017 = vpop.f32.mrb[0].mxu0
    %v1018 = vpop.f32.mrb[0].mxu0
    %1019 = vdwg.mxu0
    %v1020 = vpack.c.bf16 %v1015, %v1015
    %v1022 = vcombine.high %v587, %v587
    %v1024 = vpack.c.bf16 %v587, %v587
    %v1025 = vpack.c.bf16 %v1022, %v1022
    %v1027 = vsel %vm81, %v1020, 0
    %v1030 = vsel %vm85, %v1024, 0
    %v1033 = vsel %vm85, %v1025, 0
    %1035 = vmatprep.subr.bf16.mxu0 %v1033
    %1036 = vmatpush1.bf16.msra.mxu0 %v1030
    %1037 = vmatprep.subr.bf16.mxu0 0
    %1038 = vmatpush1.bf16.msra.mxu0 0
    %1039 = vmatprep.subr.bf16.mxu0 0
    %1040 = vmatpush1.bf16.msra.mxu0 0
    %1041 = vmatprep.subr.bf16.mxu0 0
    %1042 = vmatpush1.bf16.msra.mxu0 0
    %1043 = vmatprep.subr.bf16.mxu0 0
    %1044 = vmatpush1.bf16.msra.mxu0 0
    %1045 = vmatprep.subr.bf16.mxu0 0
    %1046 = vmatpush1.bf16.msra.mxu0 0
    %1047 = vmatprep.subr.bf16.mxu0 0
    %1048 = vmatpush1.bf16.msra.mxu0 0
    %1049 = vmatprep.subr.bf16.mxu0 0
    %1050 = vmatpush1.bf16.msra.mxu0 0
    %1051 = vmatprep.subr.bf16.mxu0 0
    %1052 = vmatpush1.bf16.msra.mxu0 0
    %1053 = vmatprep.subr.bf16.mxu0 0
    %1054 = vmatpush1.bf16.msra.mxu0 0
    %1055 = vmatprep.subr.bf16.mxu0 0
    %1056 = vmatpush1.bf16.msra.mxu0 0
    %1057 = vmatprep.subr.bf16.mxu0 0
    %1058 = vmatpush1.bf16.msra.mxu0 0
    %1059 = vmatprep.subr.bf16.mxu0 0
    %1060 = vmatpush1.bf16.msra.mxu0 0
    %1061 = vmatprep.subr.bf16.mxu0 0
    %1062 = vmatpush1.bf16.msra.mxu0 0
    %1063 = vmatprep.subr.bf16.mxu0 0
    %1064 = vmatpush1.bf16.msra.mxu0 0
    %1065 = vmatprep.subr.bf16.mxu0 0
    %1066 = vmatpush1.bf16.msra.mxu0 0
    %1067 = vmatprep.mubr.bf16.mxu0 0
    %1068 = vmatmul.mubr.bf16.gmra.mrb[0].mxu0 %v1027
    %v1069 = vpop.f32.mrb[0].mxu0
    %v1070 = vadd.f32 0.0, %v1069
    %v1071 = vpop.f32.mrb[0].mxu0
    %v1072 = vadd.f32 0.0, %v1071
    %v1073 = vpop.f32.mrb[0].mxu0
    %v1074 = vpop.f32.mrb[0].mxu0
    %1075 = vdwg.mxu0
    %v1076 = vsel %vm545, %v1070, -inf
    %v1077 = vsel %vm545, %v1072, -inf
    %v1078 = vmax.f32 %v1076, %v1077
    %1079 = vmax.xlane.f32.xlu0 %v1078
    %v1080 = vpop.xlane.xlu0 %1079
    %v1081 = vsub.f32 %v1070, %v1080
    %v1082 = vsub.f32 %v1072, %v1080
    %v1083 = vmul.f32 %v1081, 1.442695
    %v1084 = vpow.pop %v1083
    %v1085 = vmul.f32 %v1082, 1.442695
    %v1086 = vpow.pop %v1085
    %v1087 = vsel %vm545, %v1084, 0.0
    %v1088 = vsel %vm545, %v1086, 0.0
    %v1089 = vadd.f32 %v1087, %v1088
    %1090 = vadd.xlane.f32.xlu0 %v1089
    %v1091 = vpop.xlane.xlu0 %1090
    %v1092 = vrcp.pop %v1091
    %v1093 = vmul.f32 %v1084, %v1092
    %v1094 = vmul.f32 %v1086, %v1092
    %v1097 = vrot.slane %v667, 4
    %v1098 = vrot.slane %v669, 4
    %v1101 = vmul.f32 %v1093, %v1097
    %v1102 = vmul.f32 %v1094, %v1098
    %v1103 = vmul.f32 %v585, %v587
    %v1104 = vsub.f32 1.0, %v587
    %v1105 = vmul.f32 %v575, %v1104
    %v1108 = vcombine.low %v1101, %v1102
    %v1110 = vmul.f32 %v1105, %v1108
    %v1111 = vadd.f32 %v1103, %v1110
    %s1112 = scalar_lea.vmem [#allocation3], 8
    %1113 = vst [vmem:[%s1112] sm:$0xff] %v1111
    // Predicated region
    $region34: #{tpu_custom_call.1} parent=1 // pred_check
      _
    $region35: #{tpu_custom_call.1} parent=1 // pred_check_branch
      %1115 = sbr.rel (0) target = $region37
    $region36: #{tpu_custom_call.1} parent=1 // pred_region
      %s1117 = ssub.s32 256, 256
      %1118 = vsyncadd [#allocation4], %s1117
      %s1119 = sshll.u32 [#allocation3], 4
      %s1120 = int_to_ptr.vmem [resolvable:$true] %s1119
      %1125 = dma.vmem_to_hbm [thread:$0]  %s1120, 256, %s8, [#allocation4], 128, 128, 8
    $region37: #{tpu_custom_call.1} parent=1 // pred_fallthru
      _
    // Predicated region
    $region38: #{tpu_custom_call.1} parent=1 // pred_check
      _
    $region39: #{tpu_custom_call.1} parent=1 // pred_check_branch
      %1127 = sbr.rel (0) target = $region41
    $region40: #{tpu_custom_call.1} parent=1 // pred_region
      %1128 = dma.done [#allocation4], 256
    $region41: #{tpu_custom_call.1} parent=1 // pred_fallthru
      _
    %1129 = vsyncpa [#allocation4], 1

</llo_original>
